<compile_context>
chip_gen: v7x
topology: tpu7x:2x2x1
jax: 0.10.0
libtpu: 0.0.40
codegen_flags: <defaults>
</compile_context>

<pallas_src>
import jax
import jax.numpy as jnp
from jax.experimental import pallas as pl
from jax.experimental.pallas import tpu as pltpu

STATE_DIM = 6      # HIVPatient observation_space.shape[0]
N_ACTION = 4       # HIVPatient action_space.n
HIDDEN = 128

STATE_PAD = 8      # sublane-aligned input feature dim: 6 real + 1 bias column + 1 zero
BIAS_COL = STATE_DIM   # xp[:, 6] == 1.0 and w1p[6, :] == b1  -> fc1 bias folded into matmul
OUT_PAD = 128      # lane-dense padded output width (4 -> 128)
NEG_BIG = -1e30    # padded logit bias; exp(NEG_BIG - rowmax) underflows to exactly 0

_MIN_ROWS_FOR_SPLIT = 512   # below this a single grid step is cheapest (one TC anyway)


def policy_kernel(x_ref, w1_ref, w2_ref, b2_ref, out_ref):
    # x_ref:   (TB, STATE_PAD)  (col BIAS_COL holds 1.0 -> b1 emerges from the MXU reduction)
    # w1_ref:  (STATE_PAD, HIDDEN)
    # w2_ref:  (HIDDEN, OUT_PAD)   b2_ref: (1, OUT_PAD)  (cols >= N_ACTION hold NEG_BIG)
    # out_ref: (TB, OUT_PAD) lane-dense slab; padded columns come out exactly 0.
    h = jnp.dot(x_ref[...], w1_ref[...], preferred_element_type=jnp.float32)
    h = jnp.maximum(h, 0.0)
    scores = jnp.dot(h, w2_ref[...], preferred_element_type=jnp.float32) + b2_ref[...]
    # numerically-stable softmax over the padded lane axis
    m = jnp.max(scores, axis=-1, keepdims=True)
    e = jnp.exp(scores - m)
    denom = jnp.sum(e, axis=-1, keepdims=True)
    out_ref[...] = e / denom   # exact division: denom is (TB,1), approx recip buys nothing


def _choose_tiles(batch, block_b):
    """Pick the tile count first (even/balanced for v7x's 2 TCs), then a multiple-of-8 tile."""
    n_tiles = pl.cdiv(batch, block_b)
    if n_tiles == 1 and batch >= 2 * _MIN_ROWS_FOR_SPLIT:
        n_tiles = 2                                   # let both TensorCores share the work
    if n_tiles > 1 and n_tiles % 2 != 0:
        n_tiles += 1                                  # balanced even tile count
    tb = pl.cdiv(pl.cdiv(batch, n_tiles), 8) * 8
    return n_tiles, tb


def policy_forward(x, w1p, w2p, b2p, *, block_b=2048):
    """x: (B, STATE_DIM) or (STATE_DIM,). Returns softmax probs (B, N_ACTION) in float32."""
    if x.ndim == 1:
        x = x[None, :]                       # mirrors torch's unsqueeze(dim=0)
    x = x.astype(jnp.float32)
    B = x.shape[0]

    n_tiles, tb = _choose_tiles(B, block_b)
    b_pad = n_tiles * tb

    # pad batch rows (zeros), zero-extend features 6 -> 8, set bias column to 1.0
    xp = jnp.zeros((b_pad, STATE_PAD), jnp.float32)
    xp = xp.at[:B, :STATE_DIM].set(x)
    xp = xp.at[:, BIAS_COL].set(1.0)

    out = pl.pallas_call(
        policy_kernel,
        out_shape=jax.ShapeDtypeStruct((b_pad, OUT_PAD), jnp.float32),
        grid_spec=pl.GridSpec(
            grid=(n_tiles,),
            in_specs=[
                pl.BlockSpec((tb, STATE_PAD), lambda i: (i, 0)),       # x: tiled over batch
                pl.BlockSpec((STATE_PAD, HIDDEN), lambda i: (0, 0)),   # w1 (+ folded b1)
                pl.BlockSpec((HIDDEN, OUT_PAD), lambda i: (0, 0)),     # w2 (padded cols zero)
                pl.BlockSpec((1, OUT_PAD), lambda i: (0, 0)),          # b2 (padded cols NEG_BIG)
            ],
            out_specs=pl.BlockSpec((tb, OUT_PAD), lambda i: (i, 0)),
        ),
        compiler_params=pltpu.CompilerParams(
            dimension_semantics=("parallel",),
        ),
        cost_estimate=pl.CostEstimate(
            flops=2 * b_pad * HIDDEN * (STATE_PAD + OUT_PAD),
            transcendentals=b_pad * OUT_PAD,
            bytes_accessed=4 * (b_pad * (STATE_PAD + OUT_PAD)
                                + STATE_PAD * HIDDEN + HIDDEN * OUT_PAD + OUT_PAD),
        ),
    )(xp, w1p, w2p, b2p)

    return out[:B, :N_ACTION]


# jit end-to-end: fuses pad + kernel + slice and removes per-call dispatch overhead
policy_forward_jit = jax.jit(policy_forward, static_argnames=("block_b",))


def init_params(key):
    """Deterministic init mimicking nn.Linear default (uniform +-1/sqrt(fan_in)).
    Weights stored as (in_features, out_features) — transpose of torch's Linear.weight."""
    k1, k2, k3, k4 = jax.random.split(key, 4)
    bound1 = 1.0 / jnp.sqrt(STATE_DIM)
    bound2 = 1.0 / jnp.sqrt(HIDDEN)
    w1 = jax.random.uniform(k1, (STATE_DIM, HIDDEN), jnp.float32, -bound1, bound1)
    b1 = jax.random.uniform(k2, (HIDDEN,), jnp.float32, -bound1, bound1)
    w2 = jax.random.uniform(k3, (HIDDEN, N_ACTION), jnp.float32, -bound2, bound2)
    b2 = jax.random.uniform(k4, (N_ACTION,), jnp.float32, -bound2, bound2)
    return w1, b1, w2, b2


def pad_params(w1, b1, w2, b2):
    """One-time padding to kernel-friendly shapes (done once at init, not per call).
    b1 is folded into row BIAS_COL of w1p (kernel input carries 1.0 in that column)."""
    w1p = jnp.zeros((STATE_PAD, HIDDEN), jnp.float32)
    w1p = w1p.at[:STATE_DIM, :].set(w1)
    w1p = w1p.at[BIAS_COL, :].set(b1)
    w2p = jnp.zeros((HIDDEN, OUT_PAD), jnp.float32).at[:, :N_ACTION].set(w2)
    b2p = jnp.full((1, OUT_PAD), NEG_BIG, jnp.float32).at[0, :N_ACTION].set(b2)
    return w1p, w2p, b2p


if __name__ == "__main__":
    key = jax.random.PRNGKey(0)
    kx, kp, kx2 = jax.random.split(key, 3)

    w1, b1, w2, b2 = init_params(kp)
    w1p, w2p, b2p = pad_params(w1, b1, w2, b2)

    # guard the padded-logit invariant the softmax trick relies on
    assert bool(jnp.all(w2p[:, N_ACTION:] == 0.0))
    assert bool(jnp.all(b2p[0, N_ACTION:] == NEG_BIG))

    def ref_fwd(x):
        if x.ndim == 1:
            x = x[None, :]
        h = jnp.maximum(x @ w1 + b1[None, :], 0.0)
        s = h @ w2 + b2[None, :]
        return jax.nn.softmax(s, axis=1)

    # small batch (mirrors per-step inference); single grid step
    batch = 2
    x = jax.random.normal(kx, (batch, STATE_DIM), jnp.float32)
    probs = jax.block_until_ready(policy_forward_jit(x, w1p, w2p, b2p))
    p_ref = ref_fwd(x)
    assert probs.shape == (batch, N_ACTION)
    assert jnp.allclose(probs, p_ref, atol=2e-4, rtol=2e-4)
    assert jnp.allclose(jnp.sum(probs, axis=1), 1.0, atol=2e-4)

    # larger batch exercising batch tiling: 2 balanced tiles of 600 rows (zero dead rows)
    batch2 = 1200
    x2 = jax.random.normal(kx2, (batch2, STATE_DIM), jnp.float32)
    probs2 = jax.block_until_ready(policy_forward_jit(x2, w1p, w2p, b2p))
    p_ref2 = ref_fwd(x2)
    assert probs2.shape == (batch2, N_ACTION)
    assert jnp.allclose(probs2, p_ref2, atol=2e-4, rtol=2e-4)
    assert jnp.allclose(jnp.sum(probs2, axis=1), 1.0, atol=2e-4)

    # 1-D input path (torch's unsqueeze(dim=0) behavior)
    x1 = jax.random.normal(kx, (STATE_DIM,), jnp.float32)
    p1 = jax.block_until_ready(policy_forward_jit(x1, w1p, w2p, b2p))
    assert p1.shape == (1, N_ACTION)
    assert jnp.allclose(p1, ref_fwd(x1), atol=2e-4, rtol=2e-4)

    print("KERNEL_OK")
</pallas_src>

<mosaic_0001>
module attributes {stable_mosaic.version = 11 : i64} {
  func.func @policy_kernel(%arg0: i32, %arg1: memref<8x8xf32, #tpu.memory_space<vmem>>, %arg2: memref<8x128xf32, #tpu.memory_space<vmem>>, %arg3: memref<128x128xf32, #tpu.memory_space<vmem>>, %arg4: memref<1x128xf32, #tpu.memory_space<vmem>>, %arg5: memref<8x128xf32, #tpu.memory_space<vmem>>) attributes {dimension_semantics = [#tpu.dimension_semantics<parallel>], iteration_bounds = array<i64: 1>, scalar_prefetch = 0 : i64, scratch_operands = 0 : i64, tpu.core_type = #tpu.core_type<tc>, window_params = [{transform_indices = @transform_0, window_bounds = array<i64: 8, 8>}, {pipeline_mode = #tpu.pipeline_mode<synchronous>, transform_indices = @transform_1, window_bounds = array<i64: 8, 128>}, {pipeline_mode = #tpu.pipeline_mode<synchronous>, transform_indices = @transform_2, window_bounds = array<i64: 128, 128>}, {pipeline_mode = #tpu.pipeline_mode<synchronous>, transform_indices = @transform_3, window_bounds = array<i64: 1, 128>}, {transform_indices = @transform_4, window_bounds = array<i64: 8, 128>}]} {
    %c0 = arith.constant 0 : index
    %c0_0 = arith.constant 0 : index
    %0 = vector.load %arg1[%c0, %c0_0] : memref<8x8xf32, #tpu.memory_space<vmem>>, vector<8x8xf32>
    %c0_1 = arith.constant 0 : index
    %c0_2 = arith.constant 0 : index
    %1 = vector.load %arg2[%c0_1, %c0_2] : memref<8x128xf32, #tpu.memory_space<vmem>>, vector<8x128xf32>
    %cst = arith.constant dense<0.000000e+00> : vector<8x128xf32>
    %2 = tpu.matmul %0, %1, %cst {dimension_numbers = #tpu.dot_dimension_numbers<[1], [0], [0], [1], [0, 0, 1, 1], [], []>} : vector<8x8xf32>, vector<8x128xf32>, vector<8x128xf32> -> vector<8x128xf32>
    %cst_3 = arith.constant 0.000000e+00 : f32
    %3 = vector.broadcast %cst_3 : f32 to vector<8x128xf32>
    %4 = arith.maximumf %2, %3 : vector<8x128xf32>
    %c0_4 = arith.constant 0 : index
    %c0_5 = arith.constant 0 : index
    %5 = vector.load %arg3[%c0_4, %c0_5] : memref<128x128xf32, #tpu.memory_space<vmem>>, vector<128x128xf32>
    %cst_6 = arith.constant dense<0.000000e+00> : vector<8x128xf32>
    %6 = tpu.matmul %4, %5, %cst_6 {dimension_numbers = #tpu.dot_dimension_numbers<[1], [0], [0], [1], [0, 0, 1, 1], [], []>} : vector<8x128xf32>, vector<128x128xf32>, vector<8x128xf32> -> vector<8x128xf32>
    %c0_7 = arith.constant 0 : index
    %c0_8 = arith.constant 0 : index
    %7 = vector.load %arg4[%c0_7, %c0_8] : memref<1x128xf32, #tpu.memory_space<vmem>>, vector<1x128xf32>
    %8 = vector.broadcast %7 : vector<1x128xf32> to vector<8x128xf32>
    %9 = arith.addf %6, %8 : vector<8x128xf32>
    %cst_9 = arith.constant dense<0xFF800000> : vector<8xf32>
    %10 = vector.multi_reduction <maximumf>, %9, %cst_9 [1] : vector<8x128xf32> to vector<8xf32>
    %11 = vector.shape_cast %10 : vector<8xf32> to vector<8x1xf32>
    %12 = vector.broadcast %11 : vector<8x1xf32> to vector<8x128xf32>
    %13 = arith.subf %9, %12 : vector<8x128xf32>
    %14 = math.exp %13 : vector<8x128xf32>
    %cst_10 = arith.constant dense<0.000000e+00> : vector<8xf32>
    %15 = vector.multi_reduction <add>, %14, %cst_10 [1] : vector<8x128xf32> to vector<8xf32>
    %16 = vector.shape_cast %15 : vector<8xf32> to vector<8x1xf32>
    %17 = vector.broadcast %16 : vector<8x1xf32> to vector<8x128xf32>
    %18 = arith.divf %14, %17 : vector<8x128xf32>
    %c0_11 = arith.constant 0 : index
    %c0_12 = arith.constant 0 : index
    %19 = vector.load %arg5[%c0_11, %c0_12] : memref<8x128xf32, #tpu.memory_space<vmem>>, vector<8x128xf32>
    tpu.vector_store %arg5[%c0_11, %c0_12], %18 {strides = array<i32>} : memref<8x128xf32, #tpu.memory_space<vmem>>, vector<8x128xf32>,
    return
  }
  func.func @transform_0(%arg0: i32) -> (i32, i32) {
    %c0_i32 = arith.constant 0 : i32
    %c0_i32_0 = arith.constant 0 : i32
    return %arg0, %c0_i32 : i32, i32
  }
  func.func @transform_1(%arg0: i32) -> (i32, i32) {
    %c0_i32 = arith.constant 0 : i32
    %c0_i32_0 = arith.constant 0 : i32
    %c0_i32_1 = arith.constant 0 : i32
    return %c0_i32, %c0_i32_0 : i32, i32
  }
  func.func @transform_2(%arg0: i32) -> (i32, i32) {
    %c0_i32 = arith.constant 0 : i32
    %c0_i32_0 = arith.constant 0 : i32
    %c0_i32_1 = arith.constant 0 : i32
    return %c0_i32, %c0_i32_0 : i32, i32
  }
  func.func @transform_3(%arg0: i32) -> (i32, i32) {
    %c0_i32 = arith.constant 0 : i32
    %c0_i32_0 = arith.constant 0 : i32
    %c0_i32_1 = arith.constant 0 : i32
    return %c0_i32, %c0_i32_0 : i32, i32
  }
  func.func @transform_4(%arg0: i32) -> (i32, i32) {
    %c0_i32 = arith.constant 0 : i32
    %c0_i32_0 = arith.constant 0 : i32
    return %arg0, %c0_i32 : i32, i32
  }
}

</mosaic_0001>

<llo_original>
// kernel: policy_forward.1
$region0: #{policy_forward.1}
  #allocation0 [shape = 'u32[]', space=smem, size = 0x4, offset = 0x4, fixed_abs, tag = 'smem constant byte address 0x4 - core index']
  #allocation1 [shape = 'u32[144,128]{1,0:T(1,128)}', space=vmem, size = 0x12000, scoped, tag = 'internal scratch']
  %s0 = inlined_call_operand.vmem [shape: f32[8,8], index: 0, kind: input, shape index: {}]
  %s1 = inlined_call_operand.vmem [shape: f32[8,128], index: 1, kind: input, shape index: {}]
  %s2 = inlined_call_operand.hbm [shape: f32[128,128], index: 2, kind: input, shape index: {}]
  %s3 = inlined_call_operand.vmem [shape: f32[1,128], index: 3, kind: input, shape index: {}]
  %s4 = inlined_call_operand.vmem [shape: f32[8,128], index: 4, kind: output, shape index: {}]
  %s5 = sld [smem:[#allocation0]]
  $region30: #{policy_forward.1} parent=0
    _
  %s7 = ssub.s32 1, %s5
  %s8 = scalar_select 0, %s7, %s5
  $region1: #{policy_forward.1} parent=0
    #allocation2 [shape = 'u8[65536]{0}', space=vmem, size = 0x10000, scoped, tag = 'input window, operand 2, single buffered']
    #allocation3 [shape = 's32[1]{0}', space=sflag, size = 0x4, scoped, tag = 'scoped memory for policy_forward.1']
    %9 = vsyncpa [#allocation3], 0
    // Predicated region
    $region2: #{policy_forward.1} parent=1 // pred_check
      _
    $region3: #{policy_forward.1} parent=1 // pred_check_branch
      %11 = sbr.rel (0) target = $region5
    $region4: #{policy_forward.1} parent=1 // pred_region
      _
    $region5: #{policy_forward.1} parent=1 // pred_fallthru
      _
    // Predicated region
    $region6: #{policy_forward.1} parent=1 // pred_check
      _
    $region7: #{policy_forward.1} parent=1 // pred_check_branch
      %13 = sbr.rel (0) target = $region9
    $region8: #{policy_forward.1} parent=1 // pred_region
      _
    $region9: #{policy_forward.1} parent=1 // pred_fallthru
      _
    // Predicated region
    $region10: #{policy_forward.1} parent=1 // pred_check
      _
    $region11: #{policy_forward.1} parent=1 // pred_check_branch
      %15 = sbr.rel (0) target = $region13
    $region12: #{policy_forward.1} parent=1 // pred_region
      %s17 = ssub.s32 2048, 2048
      %18 = vsyncadd [#allocation3], %s17
      %s19 = sshll.u32 [#allocation2], 4
      %s20 = int_to_ptr.vmem [resolvable:$true] %s19
      %25 = dma.hbm_to_vmem [thread:$0]  %s2, 2048, %s20, [#allocation3], 128, 128, 8
    $region13: #{policy_forward.1} parent=1 // pred_fallthru
      _
    // Predicated region
    $region14: #{policy_forward.1} parent=1 // pred_check
      _
    $region15: #{policy_forward.1} parent=1 // pred_check_branch
      %27 = sbr.rel (0) target = $region17
    $region16: #{policy_forward.1} parent=1 // pred_region
      _
    $region17: #{policy_forward.1} parent=1 // pred_fallthru
      _
    // Predicated region
    $region18: #{policy_forward.1} parent=1 // pred_check
      _
    $region19: #{policy_forward.1} parent=1 // pred_check_branch
      %29 = sbr.rel (0) target = $region21
    $region20: #{policy_forward.1} parent=1 // pred_region
      %30 = dma.done [#allocation3], 2048
    $region21: #{policy_forward.1} parent=1 // pred_fallthru
      _
    %v31 = vld [vmem:[%s0] sm:$0xff]
    %v32 = vld [vmem:[%s1] sm:$0xff]
    %vm33 = vcmask 64512
    %v35 = vsel %vm33, %v31, 0
    %37 = vmatprep.subr.mxu0 0.0
    %38 = vmatpush1.msra.mxu0 %v32
    %39 = vmatprep.subr.mxu0 0.0
    %40 = vmatpush1.msra.mxu0 0.0
    %41 = vmatprep.subr.mxu0 0.0
    %42 = vmatpush1.msra.mxu0 0.0
    %43 = vmatprep.subr.mxu0 0.0
    %44 = vmatpush1.msra.mxu0 0.0
    %45 = vmatprep.subr.mxu0 0.0
    %46 = vmatpush1.msra.mxu0 0.0
    %47 = vmatprep.subr.mxu0 0.0
    %48 = vmatpush1.msra.mxu0 0.0
    %49 = vmatprep.subr.mxu0 0.0
    %50 = vmatpush1.msra.mxu0 0.0
    %51 = vmatprep.subr.mxu0 0.0
    %52 = vmatpush1.msra.mxu0 0.0
    %53 = vmatprep.subr.mxu0 0.0
    %54 = vmatpush1.msra.mxu0 0.0
    %55 = vmatprep.subr.mxu0 0.0
    %56 = vmatpush1.msra.mxu0 0.0
    %57 = vmatprep.subr.mxu0 0.0
    %58 = vmatpush1.msra.mxu0 0.0
    %59 = vmatprep.subr.mxu0 0.0
    %60 = vmatpush1.msra.mxu0 0.0
    %61 = vmatprep.subr.mxu0 0.0
    %62 = vmatpush1.msra.mxu0 0.0
    %63 = vmatprep.subr.mxu0 0.0
    %64 = vmatpush1.msra.mxu0 0.0
    %65 = vmatprep.subr.mxu0 0.0
    %66 = vmatpush1.msra.mxu0 0.0
    %67 = vmatprep.subr.mxu0 0.0
    %68 = vmatpush1.msra.mxu0 0.0
    %69 = vmatprep.subr.mxu0 0.0
    %70 = vmatpush1.msra.mxu0 0.0
    %71 = vmatprep.subr.mxu0 0.0
    %72 = vmatpush1.msra.mxu0 0.0
    %73 = vmatprep.subr.mxu0 0.0
    %74 = vmatpush1.msra.mxu0 0.0
    %75 = vmatprep.subr.mxu0 0.0
    %76 = vmatpush1.msra.mxu0 0.0
    %77 = vmatprep.subr.mxu0 0.0
    %78 = vmatpush1.msra.mxu0 0.0
    %79 = vmatprep.subr.mxu0 0.0
    %80 = vmatpush1.msra.mxu0 0.0
    %81 = vmatprep.subr.mxu0 0.0
    %82 = vmatpush1.msra.mxu0 0.0
    %83 = vmatprep.subr.mxu0 0.0
    %84 = vmatpush1.msra.mxu0 0.0
    %85 = vmatprep.subr.mxu0 0.0
    %86 = vmatpush1.msra.mxu0 0.0
    %87 = vmatprep.subr.mxu0 0.0
    %88 = vmatpush1.msra.mxu0 0.0
    %89 = vmatprep.subr.mxu0 0.0
    %90 = vmatpush1.msra.mxu0 0.0
    %91 = vmatprep.subr.mxu0 0.0
    %92 = vmatpush1.msra.mxu0 0.0
    %93 = vmatprep.subr.mxu0 0.0
    %94 = vmatpush1.msra.mxu0 0.0
    %95 = vmatprep.subr.mxu0 0.0
    %96 = vmatpush1.msra.mxu0 0.0
    %97 = vmatprep.subr.mxu0 0.0
    %98 = vmatpush1.msra.mxu0 0.0
    %99 = vmatprep.subr.mxu0 0.0
    %100 = vmatpush1.msra.mxu0 0.0
    %101 = vmatprep.mubr.f32.mxu0 0.0
    %102 = vmatmul.mubr.f32.gmra.mrb[0].mxu0 %v35
    %v103 = vpop.f32.mrb[0].mxu0
    %v104 = vadd.f32 0.0, %v103
    %v105 = vpop.f32.mrb[0].mxu0
    %106 = vdwg.mxu0
    %v107 = vmax.f32 %v104, 0.0
    %v108 = vld [vmem:[#allocation2] sm:$0xff]
    %v109 = vld [vmem:[#allocation2 + $0x8] sm:$0xff]
    %v110 = vld [vmem:[#allocation2 + $0x10] sm:$0xff]
    %v111 = vld [vmem:[#allocation2 + $0x18] sm:$0xff]
    %v112 = vld [vmem:[#allocation2 + $0x20] sm:$0xff]
    %v113 = vld [vmem:[#allocation2 + $0x28] sm:$0xff]
    %v114 = vld [vmem:[#allocation2 + $0x30] sm:$0xff]
    %v115 = vld [vmem:[#allocation2 + $0x38] sm:$0xff]
    %v116 = vld [vmem:[#allocation2 + $0x40] sm:$0xff]
    %v117 = vld [vmem:[#allocation2 + $0x48] sm:$0xff]
    %v118 = vld [vmem:[#allocation2 + $0x50] sm:$0xff]
    %v119 = vld [vmem:[#allocation2 + $0x58] sm:$0xff]
    %v120 = vld [vmem:[#allocation2 + $0x60] sm:$0xff]
    %v121 = vld [vmem:[#allocation2 + $0x68] sm:$0xff]
    %v122 = vld [vmem:[#allocation2 + $0x70] sm:$0xff]
    %v123 = vld [vmem:[#allocation2 + $0x78] sm:$0xff]
    %v124 = vld [vmem:[%s3] sm:$0x1]
    %v126 = vlaneseq
    %v127 = vshrl.u32 %v126, 7
    %v128 = vsub.s32 0, %v127
    %v129 = vrot.slane %v124, %v128
    %131 = vmatprep.subr.mxu0 0.0
    %132 = vmatpush1.msra.mxu0 %v108
    %133 = vmatprep.subr.mxu0 0.0
    %134 = vmatpush1.msra.mxu0 %v109
    %135 = vmatprep.subr.mxu0 0.0
    %136 = vmatpush1.msra.mxu0 %v110
    %137 = vmatprep.subr.mxu0 0.0
    %138 = vmatpush1.msra.mxu0 %v111
    %139 = vmatprep.subr.mxu0 0.0
    %140 = vmatpush1.msra.mxu0 %v112
    %141 = vmatprep.subr.mxu0 0.0
    %142 = vmatpush1.msra.mxu0 %v113
    %143 = vmatprep.subr.mxu0 0.0
    %144 = vmatpush1.msra.mxu0 %v114
    %145 = vmatprep.subr.mxu0 0.0
    %146 = vmatpush1.msra.mxu0 %v115
    %147 = vmatprep.subr.mxu0 0.0
    %148 = vmatpush1.msra.mxu0 %v116
    %149 = vmatprep.subr.mxu0 0.0
    %150 = vmatpush1.msra.mxu0 %v117
    %151 = vmatprep.subr.mxu0 0.0
    %152 = vmatpush1.msra.mxu0 %v118
    %153 = vmatprep.subr.mxu0 0.0
    %154 = vmatpush1.msra.mxu0 %v119
    %155 = vmatprep.subr.mxu0 0.0
    %156 = vmatpush1.msra.mxu0 %v120
    %157 = vmatprep.subr.mxu0 0.0
    %158 = vmatpush1.msra.mxu0 %v121
    %159 = vmatprep.subr.mxu0 0.0
    %160 = vmatpush1.msra.mxu0 %v122
    %161 = vmatprep.subr.mxu0 0.0
    %162 = vmatpush1.msra.mxu0 %v123
    %163 = vmatprep.subr.mxu0 0.0
    %164 = vmatpush1.msra.mxu0 0.0
    %165 = vmatprep.subr.mxu0 0.0
    %166 = vmatpush1.msra.mxu0 0.0
    %167 = vmatprep.subr.mxu0 0.0
    %168 = vmatpush1.msra.mxu0 0.0
    %169 = vmatprep.subr.mxu0 0.0
    %170 = vmatpush1.msra.mxu0 0.0
    %171 = vmatprep.subr.mxu0 0.0
    %172 = vmatpush1.msra.mxu0 0.0
    %173 = vmatprep.subr.mxu0 0.0
    %174 = vmatpush1.msra.mxu0 0.0
    %175 = vmatprep.subr.mxu0 0.0
    %176 = vmatpush1.msra.mxu0 0.0
    %177 = vmatprep.subr.mxu0 0.0
    %178 = vmatpush1.msra.mxu0 0.0
    %179 = vmatprep.subr.mxu0 0.0
    %180 = vmatpush1.msra.mxu0 0.0
    %181 = vmatprep.subr.mxu0 0.0
    %182 = vmatpush1.msra.mxu0 0.0
    %183 = vmatprep.subr.mxu0 0.0
    %184 = vmatpush1.msra.mxu0 0.0
    %185 = vmatprep.subr.mxu0 0.0
    %186 = vmatpush1.msra.mxu0 0.0
    %187 = vmatprep.subr.mxu0 0.0
    %188 = vmatpush1.msra.mxu0 0.0
    %189 = vmatprep.subr.mxu0 0.0
    %190 = vmatpush1.msra.mxu0 0.0
    %191 = vmatprep.subr.mxu0 0.0
    %192 = vmatpush1.msra.mxu0 0.0
    %193 = vmatprep.subr.mxu0 0.0
    %194 = vmatpush1.msra.mxu0 0.0
    %195 = vmatprep.mubr.f32.mxu0 0.0
    %196 = vmatmul.mubr.f32.gmra.mrb[0].mxu0 %v107
    %v197 = vpop.f32.mrb[0].mxu0
    %v198 = vadd.f32 %v129, %v197
    %v199 = vpop.f32.mrb[0].mxu0
    %200 = vdwg.mxu0
    %201 = vmax.xlane.f32.xlu0 %v198
    %v202 = vpop.xlane.xlu0 %201
    %v203 = vsub.f32 %v198, %v202
    %v204 = vmul.f32 %v203, 1.442695
    %v205 = vpow.pop %v204
    %206 = vadd.xlane.f32.xlu0 %v205
    %v207 = vpop.xlane.xlu0 %206
    %v208 = vrcp.pop %v207
    %v209 = vmul.f32 %v205, %v208
    %210 = vst [vmem:[%s4] sm:$0xff] %v209
    // Predicated region
    $region22: #{policy_forward.1} parent=1 // pred_check
      _
    $region23: #{policy_forward.1} parent=1 // pred_check_branch
      %212 = sbr.rel (0) target = $region25
    $region24: #{policy_forward.1} parent=1 // pred_region
      _
    $region25: #{policy_forward.1} parent=1 // pred_fallthru
      _
    // Predicated region
    $region26: #{policy_forward.1} parent=1 // pred_check
      _
    $region27: #{policy_forward.1} parent=1 // pred_check_branch
      %214 = sbr.rel (0) target = $region29
    $region28: #{policy_forward.1} parent=1 // pred_region
      _
    $region29: #{policy_forward.1} parent=1 // pred_fallthru
      _
    %215 = vsyncpa [#allocation3], 1

</llo_original>
